<compile_context>
chip_gen: v5e
topology: v5e:2x2
jax: 0.10.0
libtpu: 0.0.40
codegen_flags: <defaults>
</compile_context>

<pallas_src>
import functools

import jax
import jax.numpy as jnp
from jax import lax
from jax.experimental import pallas as pl
from jax.experimental.pallas import tpu as pltpu


def _round_up(x, m):
    return ((x + m - 1) // m) * m


# ----------------------------------------------------------------------------
# Pallas kernel
# ----------------------------------------------------------------------------
def _time_aware_node_kernel(
    ff_ref, fut_ref, past_ref, sf_ref, sb_ref,
    w1_ref, b1_ref, wf2_ref, bf2_ref, wb2_ref, bb2_ref,
    wn1a_ref, wn1b_ref, bn1_ref, wn2_ref, bn2_ref,
    out_ref,
    acc_f, acc_b,
    *, flow_hidden, agg_dtype,
):
    i = pl.program_id(0)                 # node-tile index
    k = pl.program_id(1)                 # edge-tile index (reduction axis)
    tile_n = acc_f.shape[0]
    tile_e = ff_ref.shape[0]

    @pl.when(k == 0)
    def _init():
        acc_f[...] = jnp.zeros_like(acc_f)
        acc_b[...] = jnp.zeros_like(acc_b)

    # --- fused flow MLPs over this edge tile --------------------------------
    # layer 1: forward & (row-permuted) backward weights stacked side-by-side.
    h = jnp.dot(ff_ref[...], w1_ref[...],
                preferred_element_type=jnp.float32) + b1_ref[...]
    h = jnp.maximum(h, 0.0)                                   # [tE, 2H]
    flow_f = (jnp.dot(h[:, :flow_hidden], wf2_ref[...],
                      preferred_element_type=jnp.float32) + bf2_ref[...])
    flow_b = (jnp.dot(h[:, flow_hidden:], wb2_ref[...],
                      preferred_element_type=jnp.float32) + bb2_ref[...])

    # --- scatter(sum) as on-chip one-hot matmul -----------------------------
    row_ids = i * tile_n + lax.broadcasted_iota(jnp.int32, (tile_n, tile_e), 0)
    scat_f = (fut_ref[...] == row_ids).astype(agg_dtype)      # [tN, tE]
    scat_p = (past_ref[...] == row_ids).astype(agg_dtype)

    acc_f[...] += jnp.dot(scat_f, flow_f.astype(agg_dtype),
                          preferred_element_type=jnp.float32)
    acc_b[...] += jnp.dot(scat_p, flow_b.astype(agg_dtype),
                          preferred_element_type=jnp.float32)

    # --- finalize: (mean) scale + node MLP, write lane-dense output ---------
    @pl.when(k == pl.num_programs(1) - 1)
    def _finalize():
        af = acc_f[...] * sf_ref[...]
        ab = acc_b[...] * sb_ref[...]
        hn = (jnp.dot(af, wn1a_ref[...], preferred_element_type=jnp.float32)
              + jnp.dot(ab, wn1b_ref[...], preferred_element_type=jnp.float32)
              + bn1_ref[...])
        hn = jnp.maximum(hn, 0.0)
        out = jnp.dot(hn, wn2_ref[...],
                      preferred_element_type=jnp.float32) + bn2_ref[...]
        out_ref[...] = out.astype(out_ref.dtype)


# ----------------------------------------------------------------------------
# Wrapper
# ----------------------------------------------------------------------------
def time_aware_node_model(x, edge_index, edge_attr, params, node_agg_mode="sum",
                          *, tile_n=256, tile_e=512, agg_dtype=jnp.float32):
    """JAX/Pallas equivalent of TimeAwareNodeModel.forward."""
    n_nodes, d_node = x.shape
    n_edges = edge_attr.shape[0]
    past_nodes = edge_index[0].astype(jnp.int32)
    future_nodes = edge_index[1].astype(jnp.int32)

    (wf1, bf1, wf2, bf2) = params["flow_forward"]
    (wb1, bb1, wb2, bb2) = params["flow_backward"]
    (wn1, bn1, wn2, bn2) = params["node_mlp"]
    flow_hidden = wf1.shape[1]
    flow_out = wf2.shape[1]
    node_hidden = wn1.shape[1]
    node_out = wn2.shape[1]

    # --- glue (plain JAX): gather + concat the forward-flow input -----------
    ff_in = jnp.concatenate([x[future_nodes], x[past_nodes], edge_attr], axis=1)
    d_in = ff_in.shape[1]

    # flow_backward's input is just a column permutation of ff_in
    # (x_past / x_future swapped), so permute wb1's rows instead.
    wb1_perm = jnp.concatenate(
        [wb1[d_node:2 * d_node], wb1[:d_node], wb1[2 * d_node:]], axis=0)
    w1_cat = jnp.concatenate([wf1, wb1_perm], axis=1)          # [Din, 2H]
    b1_cat = jnp.concatenate([bf1, bb1], axis=1)               # [1, 2H]
    wn1a, wn1b = wn1[:flow_out], wn1[flow_out:]                # fold concat of aggs

    # --- aggregation scale vectors ([N,1]; no N*E work in the wrapper) ------
    if node_agg_mode == "sum":
        scale_f = jnp.ones((n_nodes, 1), jnp.float32)
        scale_b = jnp.ones((n_nodes, 1), jnp.float32)
    elif node_agg_mode == "mean":
        ones_e = jnp.ones((n_edges,), jnp.float32)
        cnt_f = jax.ops.segment_sum(ones_e, future_nodes, num_segments=n_nodes)
        cnt_b = jax.ops.segment_sum(ones_e, past_nodes, num_segments=n_nodes)
        scale_f = (1.0 / jnp.maximum(cnt_f, 1.0))[:, None]
        scale_b = (1.0 / jnp.maximum(cnt_b, 1.0))[:, None]
    else:
        # TODO(synk): "max"/"min" scatter reductions would need an in-kernel
        # masked segmented max instead of the one-hot-matmul formulation.
        raise NotImplementedError(node_agg_mode)

    # --- pad to TPU-friendly tile sizes --------------------------------------
    t_e = min(tile_e, _round_up(n_edges, 128))
    e_pad = _round_up(n_edges, t_e)
    t_n = min(tile_n, _round_up(n_nodes, 8))
    n_pad = _round_up(n_nodes, t_n)
    out_pad = _round_up(node_out, 128)          # lane-dense output stores

    ff_in_p = jnp.pad(ff_in, ((0, e_pad - n_edges), (0, 0)))
    # padded edges get id -1 so they never match any node row (contribute 0).
    fut_p = jnp.pad(future_nodes, (0, e_pad - n_edges), constant_values=-1)[None, :]
    past_p = jnp.pad(past_nodes, (0, e_pad - n_edges), constant_values=-1)[None, :]
    scale_f_p = jnp.pad(scale_f, ((0, n_pad - n_nodes), (0, 0)), constant_values=1.0)
    scale_b_p = jnp.pad(scale_b, ((0, n_pad - n_nodes), (0, 0)), constant_values=1.0)
    wn2_p = jnp.pad(wn2, ((0, 0), (0, out_pad - node_out)))
    bn2_p = jnp.pad(bn2, ((0, 0), (0, out_pad - node_out)))

    grid = (n_pad // t_n, e_pad // t_e)

    def full(arr):
        nd = arr.ndim
        return pl.BlockSpec(arr.shape, lambda i, k, _nd=nd: (0,) * _nd)

    in_specs = [
        pl.BlockSpec((t_e, d_in), lambda i, k: (k, 0)),     # ff_in tile
        pl.BlockSpec((1, t_e), lambda i, k: (0, k)),        # future ids tile
        pl.BlockSpec((1, t_e), lambda i, k: (0, k)),        # past ids tile
        pl.BlockSpec((t_n, 1), lambda i, k: (i, 0)),        # scale_f tile
        pl.BlockSpec((t_n, 1), lambda i, k: (i, 0)),        # scale_b tile
        full(w1_cat), full(b1_cat), full(wf2), full(bf2), full(wb2), full(bb2),
        full(wn1a), full(wn1b), full(bn1), full(wn2_p), full(bn2_p),
    ]
    out_spec = pl.BlockSpec((t_n, out_pad), lambda i, k: (i, 0))

    # Advisory cost estimate (dominant terms).
    flops = int(
        2 * e_pad * d_in * 2 * flow_hidden * grid[0]        # fused flow layer 1
        + 2 * e_pad * 2 * flow_hidden * flow_out * grid[0]  # flow layer 2
        + 4 * n_pad * e_pad * flow_out                      # two aggregations
        + 2 * n_pad * (2 * flow_out * node_hidden + node_hidden * out_pad))
    weight_bytes = 4 * sum(int(w.size) for w in (w1_cat, b1_cat, wf2, bf2, wb2,
                                                 bb2, wn1a, wn1b, bn1, wn2_p, bn2_p))
    bytes_accessed = int(4 * ff_in_p.size * grid[0] + 8 * e_pad * grid[0]
                         + 4 * n_pad * out_pad + 8 * n_pad + weight_bytes)

    kernel = functools.partial(_time_aware_node_kernel,
                               flow_hidden=flow_hidden, agg_dtype=agg_dtype)

    out = pl.pallas_call(
        kernel,
        out_shape=jax.ShapeDtypeStruct((n_pad, out_pad), jnp.float32),
        grid_spec=pltpu.PrefetchScalarGridSpec(
            num_scalar_prefetch=0,
            grid=grid,
            in_specs=in_specs,
            out_specs=out_spec,
            scratch_shapes=[pltpu.VMEM((t_n, flow_out), jnp.float32),
                            pltpu.VMEM((t_n, flow_out), jnp.float32)],
        ),
        compiler_params=pltpu.CompilerParams(
            dimension_semantics=("parallel", "arbitrary")),
        cost_estimate=pl.CostEstimate(flops=flops, transcendentals=0,
                                      bytes_accessed=bytes_accessed),
    )(ff_in_p, fut_p, past_p, scale_f_p, scale_b_p,
      w1_cat, b1_cat, wf2, bf2, wb2, bb2,
      wn1a, wn1b, bn1, wn2_p, bn2_p)

    return out[:n_nodes, :node_out]


# ----------------------------------------------------------------------------
# Deterministic synthetic parameters (2-layer MLPs: Linear -> ReLU -> Linear)
# ----------------------------------------------------------------------------
def _init_mlp(key, d_in, d_hidden, d_out):
    k1, k2 = jax.random.split(key)
    s1 = 1.0 / jnp.sqrt(jnp.float32(d_in))
    s2 = 1.0 / jnp.sqrt(jnp.float32(d_hidden))
    w1 = jax.random.uniform(k1, (d_in, d_hidden), jnp.float32, -s1, s1)
    b1 = jnp.zeros((1, d_hidden), jnp.float32)
    w2 = jax.random.uniform(k2, (d_hidden, d_out), jnp.float32, -s2, s2)
    b2 = jnp.zeros((1, d_out), jnp.float32)
    return (w1, b1, w2, b2)


def _mlp_ref(x, p):
    w1, b1, w2, b2 = p
    return jnp.maximum(x @ w1 + b1, 0.0) @ w2 + b2


def _reference(x, edge_index, edge_attr, params, node_agg_mode):
    """Pure-JAX reference of the PyTorch forward pass."""
    n = x.shape[0]
    past, fut = edge_index[0], edge_index[1]
    ff = _mlp_ref(jnp.concatenate([x[fut], x[past], edge_attr], 1), params["flow_forward"])
    fb = _mlp_ref(jnp.concatenate([x[past], x[fut], edge_attr], 1), params["flow_backward"])
    agg_f = jax.ops.segment_sum(ff, fut, num_segments=n)
    agg_b = jax.ops.segment_sum(fb, past, num_segments=n)
    if node_agg_mode == "mean":
        cf = jnp.maximum(jax.ops.segment_sum(jnp.ones_like(fut, jnp.float32), fut, num_segments=n), 1.0)
        cp = jnp.maximum(jax.ops.segment_sum(jnp.ones_like(past, jnp.float32), past, num_segments=n), 1.0)
        agg_f = agg_f / cf[:, None]
        agg_b = agg_b / cp[:, None]
    return _mlp_ref(jnp.concatenate([agg_f, agg_b], 1), params["node_mlp"])


# ----------------------------------------------------------------------------
if __name__ == "__main__":
    key = jax.random.PRNGKey(0)
    k_x, k_e, k_ei, k_f, k_b, k_n, k_x2, k_e2, k_ei2 = jax.random.split(key, 9)

    D_NODE, D_EDGE = 8, 8
    FLOW_HIDDEN, FLOW_OUT = 32, 16      # each flow MLP outputs 16
    NODE_HIDDEN, NODE_OUT = 32, 8       # node_mlp input = 2 * FLOW_OUT = 32
    flow_in_dim = 2 * D_NODE + D_EDGE
    params = {
        "flow_forward": _init_mlp(k_f, flow_in_dim, FLOW_HIDDEN, FLOW_OUT),
        "flow_backward": _init_mlp(k_b, flow_in_dim, FLOW_HIDDEN, FLOW_OUT),
        "node_mlp": _init_mlp(k_n, 2 * FLOW_OUT, NODE_HIDDEN, NODE_OUT),
    }

    # --- test 1: small graph, single-tile grid, "sum" aggregation -----------
    N, E = 16, 32
    x = jax.random.normal(k_x, (N, D_NODE), jnp.float32)
    edge_attr = jax.random.normal(k_e, (E, D_EDGE), jnp.float32)
    edge_index = jax.random.randint(k_ei, (2, E), 0, N, dtype=jnp.int32)

    out = time_aware_node_model(x, edge_index, edge_attr, params, "sum")
    out = jax.block_until_ready(out)
    ref = _reference(x, edge_index, edge_attr, params, "sum")
    assert out.shape == (N, NODE_OUT), out.shape
    assert jnp.allclose(out, ref, atol=1e-3, rtol=1e-3), float(jnp.abs(out - ref).max())

    # --- test 2: multi-tile grid (node + edge tiling, padding), "mean" ------
    N2, E2 = 40, 300
    x2 = jax.random.normal(k_x2, (N2, D_NODE), jnp.float32)
    edge_attr2 = jax.random.normal(k_e2, (E2, D_EDGE), jnp.float32)
    edge_index2 = jax.random.randint(k_ei2, (2, E2), 0, N2, dtype=jnp.int32)

    out2 = time_aware_node_model(x2, edge_index2, edge_attr2, params, "mean",
                                 tile_n=16, tile_e=128)
    out2 = jax.block_until_ready(out2)
    ref2 = _reference(x2, edge_index2, edge_attr2, params, "mean")
    assert out2.shape == (N2, NODE_OUT), out2.shape
    assert jnp.allclose(out2, ref2, atol=1e-3, rtol=1e-3), float(jnp.abs(out2 - ref2).max())

    print("KERNEL_OK")
</pallas_src>

<mosaic_0001>
module attributes {stable_mosaic.version = 11 : i64} {
  func.func @_time_aware_node_kernel(%arg0: i32, %arg1: i32, %arg2: memref<128x24xf32, #tpu.memory_space<vmem>>, %arg3: memref<1x128xi32, #tpu.memory_space<vmem>>, %arg4: memref<1x128xi32, #tpu.memory_space<vmem>>, %arg5: memref<16x1xf32, #tpu.memory_space<vmem>>, %arg6: memref<16x1xf32, #tpu.memory_space<vmem>>, %arg7: memref<24x64xf32, #tpu.memory_space<vmem>>, %arg8: memref<1x64xf32, #tpu.memory_space<vmem>>, %arg9: memref<32x16xf32, #tpu.memory_space<vmem>>, %arg10: memref<1x16xf32, #tpu.memory_space<vmem>>, %arg11: memref<32x16xf32, #tpu.memory_space<vmem>>, %arg12: memref<1x16xf32, #tpu.memory_space<vmem>>, %arg13: memref<16x32xf32, #tpu.memory_space<vmem>>, %arg14: memref<16x32xf32, #tpu.memory_space<vmem>>, %arg15: memref<1x32xf32, #tpu.memory_space<vmem>>, %arg16: memref<32x128xf32, #tpu.memory_space<vmem>>, %arg17: memref<1x128xf32, #tpu.memory_space<vmem>>, %arg18: memref<16x128xf32, #tpu.memory_space<vmem>>, %arg19: memref<16x16xf32, #tpu.memory_space<vmem>>, %arg20: memref<16x16xf32, #tpu.memory_space<vmem>>) attributes {dimension_semantics = [#tpu.dimension_semantics<parallel>, #tpu.dimension_semantics<arbitrary>], iteration_bounds = array<i64: 1, 1>, scalar_prefetch = 0 : i64, scratch_operands = 2 : i64, tpu.core_type = #tpu.core_type<tc>, window_params = [{transform_indices = @transform_0, window_bounds = array<i64: 128, 24>}, {transform_indices = @transform_1, window_bounds = array<i64: 1, 128>}, {transform_indices = @transform_2, window_bounds = array<i64: 1, 128>}, {transform_indices = @transform_3, window_bounds = array<i64: 16, 1>}, {transform_indices = @transform_4, window_bounds = array<i64: 16, 1>}, {pipeline_mode = #tpu.pipeline_mode<synchronous>, transform_indices = @transform_5, window_bounds = array<i64: 24, 64>}, {pipeline_mode = #tpu.pipeline_mode<synchronous>, transform_indices = @transform_6, window_bounds = array<i64: 1, 64>}, {pipeline_mode = #tpu.pipeline_mode<synchronous>, transform_indices = @transform_7, window_bounds = array<i64: 32, 16>}, {pipeline_mode = #tpu.pipeline_mode<synchronous>, transform_indices = @transform_8, window_bounds = array<i64: 1, 16>}, {pipeline_mode = #tpu.pipeline_mode<synchronous>, transform_indices = @transform_9, window_bounds = array<i64: 32, 16>}, {pipeline_mode = #tpu.pipeline_mode<synchronous>, transform_indices = @transform_10, window_bounds = array<i64: 1, 16>}, {pipeline_mode = #tpu.pipeline_mode<synchronous>, transform_indices = @transform_11, window_bounds = array<i64: 16, 32>}, {pipeline_mode = #tpu.pipeline_mode<synchronous>, transform_indices = @transform_12, window_bounds = array<i64: 16, 32>}, {pipeline_mode = #tpu.pipeline_mode<synchronous>, transform_indices = @transform_13, window_bounds = array<i64: 1, 32>}, {pipeline_mode = #tpu.pipeline_mode<synchronous>, transform_indices = @transform_14, window_bounds = array<i64: 32, 128>}, {pipeline_mode = #tpu.pipeline_mode<synchronous>, transform_indices = @transform_15, window_bounds = array<i64: 1, 128>}, {transform_indices = @transform_16, window_bounds = array<i64: 16, 128>}]} {
    %c0_i32 = arith.constant 0 : i32
    %0 = arith.cmpi eq, %arg1, %c0_i32 : i32
    %1 = arith.extui %0 : i1 to i32
    %c0_i32_0 = arith.constant 0 : i32
    %2 = arith.cmpi ne, %1, %c0_i32_0 : i32
    scf.if %2 {
      %cst_33 = arith.constant 0.000000e+00 : f32
      %48 = vector.broadcast %cst_33 : f32 to vector<16x16xf32>
      %c0_34 = arith.constant 0 : index
      %c0_35 = arith.constant 0 : index
      %49 = vector.load %arg19[%c0_34, %c0_35] : memref<16x16xf32, #tpu.memory_space<vmem>>, vector<16x16xf32>
      tpu.vector_store %arg19[%c0_34, %c0_35], %48 {strides = array<i32>} : memref<16x16xf32, #tpu.memory_space<vmem>>, vector<16x16xf32>,
      %cst_36 = arith.constant 0.000000e+00 : f32
      %50 = vector.broadcast %cst_36 : f32 to vector<16x16xf32>
      %c0_37 = arith.constant 0 : index
      %c0_38 = arith.constant 0 : index
      %51 = vector.load %arg20[%c0_37, %c0_38] : memref<16x16xf32, #tpu.memory_space<vmem>>, vector<16x16xf32>
      tpu.vector_store %arg20[%c0_37, %c0_38], %50 {strides = array<i32>} : memref<16x16xf32, #tpu.memory_space<vmem>>, vector<16x16xf32>,
    } else {
    }
    %c0 = arith.constant 0 : index
    %c0_1 = arith.constant 0 : index
    %3 = vector.load %arg2[%c0, %c0_1] : memref<128x24xf32, #tpu.memory_space<vmem>>, vector<128x24xf32>
    %c0_2 = arith.constant 0 : index
    %c0_3 = arith.constant 0 : index
    %4 = vector.load %arg7[%c0_2, %c0_3] : memref<24x64xf32, #tpu.memory_space<vmem>>, vector<24x64xf32>
    %cst = arith.constant dense<0.000000e+00> : vector<128x64xf32>
    %5 = tpu.matmul %3, %4, %cst {dimension_numbers = #tpu.dot_dimension_numbers<[1], [0], [0], [1], [0, 0, 1, 1], [], []>} : vector<128x24xf32>, vector<24x64xf32>, vector<128x64xf32> -> vector<128x64xf32>
    %c0_4 = arith.constant 0 : index
    %c0_5 = arith.constant 0 : index
    %6 = vector.load %arg8[%c0_4, %c0_5] : memref<1x64xf32, #tpu.memory_space<vmem>>, vector<1x64xf32>
    %7 = vector.broadcast %6 : vector<1x64xf32> to vector<128x64xf32>
    %8 = arith.addf %5, %7 : vector<128x64xf32>
    %cst_6 = arith.constant 0.000000e+00 : f32
    %9 = vector.broadcast %cst_6 : f32 to vector<128x64xf32>
    %10 = arith.maximumf %8, %9 : vector<128x64xf32>
    %11 = vector.extract_strided_slice %10 {offsets = [0, 0], sizes = [128, 32], strides = [1, 1]} : vector<128x64xf32> to vector<128x32xf32>
    %c0_7 = arith.constant 0 : index
    %c0_8 = arith.constant 0 : index
    %12 = vector.load %arg9[%c0_7, %c0_8] : memref<32x16xf32, #tpu.memory_space<vmem>>, vector<32x16xf32>
    %cst_9 = arith.constant dense<0.000000e+00> : vector<128x16xf32>
    %13 = tpu.matmul %11, %12, %cst_9 {dimension_numbers = #tpu.dot_dimension_numbers<[1], [0], [0], [1], [0, 0, 1, 1], [], []>} : vector<128x32xf32>, vector<32x16xf32>, vector<128x16xf32> -> vector<128x16xf32>
    %c0_10 = arith.constant 0 : index
    %c0_11 = arith.constant 0 : index
    %14 = vector.load %arg10[%c0_10, %c0_11] : memref<1x16xf32, #tpu.memory_space<vmem>>, vector<1x16xf32>
    %15 = vector.broadcast %14 : vector<1x16xf32> to vector<128x16xf32>
    %16 = arith.addf %13, %15 : vector<128x16xf32>
    %17 = vector.extract_strided_slice %10 {offsets = [0, 32], sizes = [128, 32], strides = [1, 1]} : vector<128x64xf32> to vector<128x32xf32>
    %c0_12 = arith.constant 0 : index
    %c0_13 = arith.constant 0 : index
    %18 = vector.load %arg11[%c0_12, %c0_13] : memref<32x16xf32, #tpu.memory_space<vmem>>, vector<32x16xf32>
    %cst_14 = arith.constant dense<0.000000e+00> : vector<128x16xf32>
    %19 = tpu.matmul %17, %18, %cst_14 {dimension_numbers = #tpu.dot_dimension_numbers<[1], [0], [0], [1], [0, 0, 1, 1], [], []>} : vector<128x32xf32>, vector<32x16xf32>, vector<128x16xf32> -> vector<128x16xf32>
    %c0_15 = arith.constant 0 : index
    %c0_16 = arith.constant 0 : index
    %20 = vector.load %arg12[%c0_15, %c0_16] : memref<1x16xf32, #tpu.memory_space<vmem>>, vector<1x16xf32>
    %21 = vector.broadcast %20 : vector<1x16xf32> to vector<128x16xf32>
    %22 = arith.addf %19, %21 : vector<128x16xf32>
    %c16_i32 = arith.constant 16 : i32
    %23 = arith.muli %arg0, %c16_i32 : i32
    %24 = tpu.iota {dimensions = array<i32: 0>} : vector<16x128xi32>
    %25 = vector.broadcast %23 : i32 to vector<16x128xi32>
    %26 = arith.addi %25, %24 : vector<16x128xi32>
    %c0_17 = arith.constant 0 : index
    %c0_18 = arith.constant 0 : index
    %27 = vector.load %arg3[%c0_17, %c0_18] : memref<1x128xi32, #tpu.memory_space<vmem>>, vector<1x128xi32>
    %28 = vector.broadcast %27 : vector<1x128xi32> to vector<16x128xi32>
    %29 = arith.cmpi eq, %28, %26 : vector<16x128xi32>
    %30 = arith.extui %29 : vector<16x128xi1> to vector<16x128xi32>
    %31 = arith.sitofp %30 : vector<16x128xi32> to vector<16x128xf32>
    %c0_19 = arith.constant 0 : index
    %c0_20 = arith.constant 0 : index
    %32 = vector.load %arg4[%c0_19, %c0_20] : memref<1x128xi32, #tpu.memory_space<vmem>>, vector<1x128xi32>
    %33 = vector.broadcast %32 : vector<1x128xi32> to vector<16x128xi32>
    %34 = arith.cmpi eq, %33, %26 : vector<16x128xi32>
    %35 = arith.extui %34 : vector<16x128xi1> to vector<16x128xi32>
    %36 = arith.sitofp %35 : vector<16x128xi32> to vector<16x128xf32>
    %c0_21 = arith.constant 0 : index
    %c0_22 = arith.constant 0 : index
    %37 = vector.load %arg19[%c0_21, %c0_22] : memref<16x16xf32, #tpu.memory_space<vmem>>, vector<16x16xf32>
    %cst_23 = arith.constant dense<0.000000e+00> : vector<16x16xf32>
    %38 = tpu.matmul %31, %16, %cst_23 {dimension_numbers = #tpu.dot_dimension_numbers<[1], [0], [0], [1], [0, 0, 1, 1], [], []>} : vector<16x128xf32>, vector<128x16xf32>, vector<16x16xf32> -> vector<16x16xf32>
    %39 = arith.addf %37, %38 : vector<16x16xf32>
    %c0_24 = arith.constant 0 : index
    %c0_25 = arith.constant 0 : index
    %40 = vector.load %arg19[%c0_24, %c0_25] : memref<16x16xf32, #tpu.memory_space<vmem>>, vector<16x16xf32>
    tpu.vector_store %arg19[%c0_24, %c0_25], %39 {strides = array<i32>} : memref<16x16xf32, #tpu.memory_space<vmem>>, vector<16x16xf32>,
    %c0_26 = arith.constant 0 : index
    %c0_27 = arith.constant 0 : index
    %41 = vector.load %arg20[%c0_26, %c0_27] : memref<16x16xf32, #tpu.memory_space<vmem>>, vector<16x16xf32>
    %cst_28 = arith.constant dense<0.000000e+00> : vector<16x16xf32>
    %42 = tpu.matmul %36, %22, %cst_28 {dimension_numbers = #tpu.dot_dimension_numbers<[1], [0], [0], [1], [0, 0, 1, 1], [], []>} : vector<16x128xf32>, vector<128x16xf32>, vector<16x16xf32> -> vector<16x16xf32>
    %43 = arith.addf %41, %42 : vector<16x16xf32>
    %c0_29 = arith.constant 0 : index
    %c0_30 = arith.constant 0 : index
    %44 = vector.load %arg20[%c0_29, %c0_30] : memref<16x16xf32, #tpu.memory_space<vmem>>, vector<16x16xf32>
    tpu.vector_store %arg20[%c0_29, %c0_30], %43 {strides = array<i32>} : memref<16x16xf32, #tpu.memory_space<vmem>>, vector<16x16xf32>,
    %c0_i32_31 = arith.constant 0 : i32
    %45 = arith.cmpi eq, %arg1, %c0_i32_31 : i32
    %46 = arith.extui %45 : i1 to i32
    %c0_i32_32 = arith.constant 0 : i32
    %47 = arith.cmpi ne, %46, %c0_i32_32 : i32
    scf.if %47 {
      %c0_33 = arith.constant 0 : index
      %c0_34 = arith.constant 0 : index
      %48 = vector.load %arg19[%c0_33, %c0_34] : memref<16x16xf32, #tpu.memory_space<vmem>>, vector<16x16xf32>
      %c0_35 = arith.constant 0 : index
      %c0_36 = arith.constant 0 : index
      %49 = vector.load %arg5[%c0_35, %c0_36] : memref<16x1xf32, #tpu.memory_space<vmem>>, vector<16x1xf32>
      %50 = vector.broadcast %49 : vector<16x1xf32> to vector<16x16xf32>
      %51 = arith.mulf %48, %50 : vector<16x16xf32>
      %c0_37 = arith.constant 0 : index
      %c0_38 = arith.constant 0 : index
      %52 = vector.load %arg20[%c0_37, %c0_38] : memref<16x16xf32, #tpu.memory_space<vmem>>, vector<16x16xf32>
      %c0_39 = arith.constant 0 : index
      %c0_40 = arith.constant 0 : index
      %53 = vector.load %arg6[%c0_39, %c0_40] : memref<16x1xf32, #tpu.memory_space<vmem>>, vector<16x1xf32>
      %54 = vector.broadcast %53 : vector<16x1xf32> to vector<16x16xf32>
      %55 = arith.mulf %52, %54 : vector<16x16xf32>
      %c0_41 = arith.constant 0 : index
      %c0_42 = arith.constant 0 : index
      %56 = vector.load %arg13[%c0_41, %c0_42] : memref<16x32xf32, #tpu.memory_space<vmem>>, vector<16x32xf32>
      %cst_43 = arith.constant dense<0.000000e+00> : vector<16x32xf32>
      %57 = tpu.matmul %51, %56, %cst_43 {dimension_numbers = #tpu.dot_dimension_numbers<[1], [0], [0], [1], [0, 0, 1, 1], [], []>} : vector<16x16xf32>, vector<16x32xf32>, vector<16x32xf32> -> vector<16x32xf32>
      %c0_44 = arith.constant 0 : index
      %c0_45 = arith.constant 0 : index
      %58 = vector.load %arg14[%c0_44, %c0_45] : memref<16x32xf32, #tpu.memory_space<vmem>>, vector<16x32xf32>
      %cst_46 = arith.constant dense<0.000000e+00> : vector<16x32xf32>
      %59 = tpu.matmul %55, %58, %cst_46 {dimension_numbers = #tpu.dot_dimension_numbers<[1], [0], [0], [1], [0, 0, 1, 1], [], []>} : vector<16x16xf32>, vector<16x32xf32>, vector<16x32xf32> -> vector<16x32xf32>
      %60 = arith.addf %57, %59 : vector<16x32xf32>
      %c0_47 = arith.constant 0 : index
      %c0_48 = arith.constant 0 : index
      %61 = vector.load %arg15[%c0_47, %c0_48] : memref<1x32xf32, #tpu.memory_space<vmem>>, vector<1x32xf32>
      %62 = vector.broadcast %61 : vector<1x32xf32> to vector<16x32xf32>
      %63 = arith.addf %60, %62 : vector<16x32xf32>
      %cst_49 = arith.constant 0.000000e+00 : f32
      %64 = vector.broadcast %cst_49 : f32 to vector<16x32xf32>
      %65 = arith.maximumf %63, %64 : vector<16x32xf32>
      %c0_50 = arith.constant 0 : index
      %c0_51 = arith.constant 0 : index
      %66 = vector.load %arg16[%c0_50, %c0_51] : memref<32x128xf32, #tpu.memory_space<vmem>>, vector<32x128xf32>
      %cst_52 = arith.constant dense<0.000000e+00> : vector<16x128xf32>
      %67 = tpu.matmul %65, %66, %cst_52 {dimension_numbers = #tpu.dot_dimension_numbers<[1], [0], [0], [1], [0, 0, 1, 1], [], []>} : vector<16x32xf32>, vector<32x128xf32>, vector<16x128xf32> -> vector<16x128xf32>
      %c0_53 = arith.constant 0 : index
      %c0_54 = arith.constant 0 : index
      %68 = vector.load %arg17[%c0_53, %c0_54] : memref<1x128xf32, #tpu.memory_space<vmem>>, vector<1x128xf32>
      %69 = vector.broadcast %68 : vector<1x128xf32> to vector<16x128xf32>
      %70 = arith.addf %67, %69 : vector<16x128xf32>
      %c0_55 = arith.constant 0 : index
      %c0_56 = arith.constant 0 : index
      %71 = vector.load %arg18[%c0_55, %c0_56] : memref<16x128xf32, #tpu.memory_space<vmem>>, vector<16x128xf32>
      tpu.vector_store %arg18[%c0_55, %c0_56], %70 {strides = array<i32>} : memref<16x128xf32, #tpu.memory_space<vmem>>, vector<16x128xf32>,
    } else {
    }
    return
  }
  func.func @transform_0(%arg0: i32, %arg1: i32) -> (i32, i32) {
    %c0_i32 = arith.constant 0 : i32
    %c0_i32_0 = arith.constant 0 : i32
    return %arg1, %c0_i32 : i32, i32
  }
  func.func @transform_1(%arg0: i32, %arg1: i32) -> (i32, i32) {
    %c0_i32 = arith.constant 0 : i32
    %c0_i32_0 = arith.constant 0 : i32
    return %c0_i32, %arg1 : i32, i32
  }
  func.func @transform_2(%arg0: i32, %arg1: i32) -> (i32, i32) {
    %c0_i32 = arith.constant 0 : i32
    %c0_i32_0 = arith.constant 0 : i32
    return %c0_i32, %arg1 : i32, i32
  }
  func.func @transform_3(%arg0: i32, %arg1: i32) -> (i32, i32) {
    %c0_i32 = arith.constant 0 : i32
    %c0_i32_0 = arith.constant 0 : i32
    return %arg0, %c0_i32 : i32, i32
  }
  func.func @transform_4(%arg0: i32, %arg1: i32) -> (i32, i32) {
    %c0_i32 = arith.constant 0 : i32
    %c0_i32_0 = arith.constant 0 : i32
    return %arg0, %c0_i32 : i32, i32
  }
  func.func @transform_5(%arg0: i32, %arg1: i32) -> (i32, i32) {
    %c0_i32 = arith.constant 0 : i32
    %c0_i32_0 = arith.constant 0 : i32
    %c0_i32_1 = arith.constant 0 : i32
    return %c0_i32, %c0_i32_0 : i32, i32
  }
  func.func @transform_6(%arg0: i32, %arg1: i32) -> (i32, i32) {
    %c0_i32 = arith.constant 0 : i32
    %c0_i32_0 = arith.constant 0 : i32
    %c0_i32_1 = arith.constant 0 : i32
    return %c0_i32, %c0_i32_0 : i32, i32
  }
  func.func @transform_7(%arg0: i32, %arg1: i32) -> (i32, i32) {
    %c0_i32 = arith.constant 0 : i32
    %c0_i32_0 = arith.constant 0 : i32
    %c0_i32_1 = arith.constant 0 : i32
    return %c0_i32, %c0_i32_0 : i32, i32
  }
  func.func @transform_8(%arg0: i32, %arg1: i32) -> (i32, i32) {
    %c0_i32 = arith.constant 0 : i32
    %c0_i32_0 = arith.constant 0 : i32
    %c0_i32_1 = arith.constant 0 : i32
    return %c0_i32, %c0_i32_0 : i32, i32
  }
  func.func @transform_9(%arg0: i32, %arg1: i32) -> (i32, i32) {
    %c0_i32 = arith.constant 0 : i32
    %c0_i32_0 = arith.constant 0 : i32
    %c0_i32_1 = arith.constant 0 : i32
    return %c0_i32, %c0_i32_0 : i32, i32
  }
  func.func @transform_10(%arg0: i32, %arg1: i32) -> (i32, i32) {
    %c0_i32 = arith.constant 0 : i32
    %c0_i32_0 = arith.constant 0 : i32
    %c0_i32_1 = arith.constant 0 : i32
    return %c0_i32, %c0_i32_0 : i32, i32
  }
  func.func @transform_11(%arg0: i32, %arg1: i32) -> (i32, i32) {
    %c0_i32 = arith.constant 0 : i32
    %c0_i32_0 = arith.constant 0 : i32
    %c0_i32_1 = arith.constant 0 : i32
    return %c0_i32, %c0_i32_0 : i32, i32
  }
  func.func @transform_12(%arg0: i32, %arg1: i32) -> (i32, i32) {
    %c0_i32 = arith.constant 0 : i32
    %c0_i32_0 = arith.constant 0 : i32
    %c0_i32_1 = arith.constant 0 : i32
    return %c0_i32, %c0_i32_0 : i32, i32
  }
  func.func @transform_13(%arg0: i32, %arg1: i32) -> (i32, i32) {
    %c0_i32 = arith.constant 0 : i32
    %c0_i32_0 = arith.constant 0 : i32
    %c0_i32_1 = arith.constant 0 : i32
    return %c0_i32, %c0_i32_0 : i32, i32
  }
  func.func @transform_14(%arg0: i32, %arg1: i32) -> (i32, i32) {
    %c0_i32 = arith.constant 0 : i32
    %c0_i32_0 = arith.constant 0 : i32
    %c0_i32_1 = arith.constant 0 : i32
    return %c0_i32, %c0_i32_0 : i32, i32
  }
  func.func @transform_15(%arg0: i32, %arg1: i32) -> (i32, i32) {
    %c0_i32 = arith.constant 0 : i32
    %c0_i32_0 = arith.constant 0 : i32
    %c0_i32_1 = arith.constant 0 : i32
    return %c0_i32, %c0_i32_0 : i32, i32
  }
  func.func @transform_16(%arg0: i32, %arg1: i32) -> (i32, i32) {
    %c0_i32 = arith.constant 0 : i32
    %c0_i32_0 = arith.constant 0 : i32
    return %arg0, %c0_i32 : i32, i32
  }
}

</mosaic_0001>

<llo_original>
// kernel: tpu_custom_call.1
$region0: #{tpu_custom_call.1}
  #allocation0 [shape = 'u32[]', space=smem, size = 0x4, offset = 0x4, fixed_abs, tag = 'smem constant byte address 0x4 - core index']
  #allocation1 [shape = 'u32[72,128]{1,0:T(1,128)}', space=vmem, size = 0x9000, scoped, tag = 'internal scratch']
  #allocation2 [shape = 'f32[16,16]{1,0:T(8,128)}', space=vmem, size = 0x2000, scoped, tag = 'scratch operand']
  #allocation3 [shape = 'f32[16,16]{1,0:T(8,128)}', space=vmem, size = 0x2000, scoped, tag = 'scratch operand']
  %s0 = inlined_call_operand.vmem [shape: f32[128,24], index: 0, kind: input, shape index: {}]
  %s1 = inlined_call_operand.vmem [shape: s32[1,128], index: 1, kind: input, shape index: {}]
  %s2 = inlined_call_operand.vmem [shape: s32[1,128], index: 2, kind: input, shape index: {}]
  %s3 = inlined_call_operand.vmem [shape: f32[16,1], index: 3, kind: input, shape index: {}]
  %s4 = inlined_call_operand.vmem [shape: f32[16,1], index: 4, kind: input, shape index: {}]
  %s5 = inlined_call_operand.vmem [shape: f32[24,64], index: 5, kind: input, shape index: {}]
  %s6 = inlined_call_operand.vmem [shape: f32[1,64], index: 6, kind: input, shape index: {}]
  %s7 = inlined_call_operand.vmem [shape: f32[32,16], index: 7, kind: input, shape index: {}]
  %s8 = inlined_call_operand.vmem [shape: f32[1,16], index: 8, kind: input, shape index: {}]
  %s9 = inlined_call_operand.vmem [shape: f32[32,16], index: 9, kind: input, shape index: {}]
  %s10 = inlined_call_operand.vmem [shape: f32[1,16], index: 10, kind: input, shape index: {}]
  %s11 = inlined_call_operand.vmem [shape: f32[16,32], index: 11, kind: input, shape index: {}]
  %s12 = inlined_call_operand.vmem [shape: f32[16,32], index: 12, kind: input, shape index: {}]
  %s13 = inlined_call_operand.vmem [shape: f32[1,32], index: 13, kind: input, shape index: {}]
  %s14 = inlined_call_operand.vmem [shape: f32[32,128], index: 14, kind: input, shape index: {}]
  %s15 = inlined_call_operand.vmem [shape: f32[1,128], index: 15, kind: input, shape index: {}]
  %s16 = inlined_call_operand.hbm [shape: f32[16,128], index: 16, kind: output, shape index: {}]
  %s17 = sld [smem:[#allocation0]]
  $region82: #{tpu_custom_call.1} parent=0
    _
  %s19 = ssub.s32 1, %s17
  %s20 = scalar_select 0, %s19, %s17
  $region1: #{tpu_custom_call.1} parent=0
    #allocation4 [shape = 'u8[8192]{0}', space=vmem, size = 0x2000, scoped, tag = 'output window, operand 0, single buffered']
    #allocation5 [shape = 's32[1]{0}', space=sflag, size = 0x4, scoped, tag = 'scoped memory for tpu_custom_call.1']
    %21 = vsyncpa [#allocation5], 0
    // Predicated region
    $region2: #{tpu_custom_call.1} parent=1 // pred_check
      _
    $region3: #{tpu_custom_call.1} parent=1 // pred_check_branch
      %23 = sbr.rel (0) target = $region5
    $region4: #{tpu_custom_call.1} parent=1 // pred_region
      _
    $region5: #{tpu_custom_call.1} parent=1 // pred_fallthru
      _
    // Predicated region
    $region6: #{tpu_custom_call.1} parent=1 // pred_check
      _
    $region7: #{tpu_custom_call.1} parent=1 // pred_check_branch
      %25 = sbr.rel (0) target = $region9
    $region8: #{tpu_custom_call.1} parent=1 // pred_region
      _
    $region9: #{tpu_custom_call.1} parent=1 // pred_fallthru
      _
    // Predicated region
    $region10: #{tpu_custom_call.1} parent=1 // pred_check
      _
    $region11: #{tpu_custom_call.1} parent=1 // pred_check_branch
      %27 = sbr.rel (0) target = $region13
    $region12: #{tpu_custom_call.1} parent=1 // pred_region
      _
    $region13: #{tpu_custom_call.1} parent=1 // pred_fallthru
      _
    // Predicated region
    $region14: #{tpu_custom_call.1} parent=1 // pred_check
      _
    $region15: #{tpu_custom_call.1} parent=1 // pred_check_branch
      %29 = sbr.rel (0) target = $region17
    $region16: #{tpu_custom_call.1} parent=1 // pred_region
      _
    $region17: #{tpu_custom_call.1} parent=1 // pred_fallthru
      _
    // Predicated region
    $region18: #{tpu_custom_call.1} parent=1 // pred_check
      _
    $region19: #{tpu_custom_call.1} parent=1 // pred_check_branch
      %31 = sbr.rel (0) target = $region21
    $region20: #{tpu_custom_call.1} parent=1 // pred_region
      _
    $region21: #{tpu_custom_call.1} parent=1 // pred_fallthru
      _
    // Predicated region
    $region22: #{tpu_custom_call.1} parent=1 // pred_check
      _
    $region23: #{tpu_custom_call.1} parent=1 // pred_check_branch
      %33 = sbr.rel (0) target = $region25
    $region24: #{tpu_custom_call.1} parent=1 // pred_region
      _
    $region25: #{tpu_custom_call.1} parent=1 // pred_fallthru
      _
    // Predicated region
    $region26: #{tpu_custom_call.1} parent=1 // pred_check
      _
    $region27: #{tpu_custom_call.1} parent=1 // pred_check_branch
      %35 = sbr.rel (0) target = $region29
    $region28: #{tpu_custom_call.1} parent=1 // pred_region
      _
    $region29: #{tpu_custom_call.1} parent=1 // pred_fallthru
      _
    // Predicated region
    $region30: #{tpu_custom_call.1} parent=1 // pred_check
      _
    $region31: #{tpu_custom_call.1} parent=1 // pred_check_branch
      %37 = sbr.rel (0) target = $region33
    $region32: #{tpu_custom_call.1} parent=1 // pred_region
      _
    $region33: #{tpu_custom_call.1} parent=1 // pred_fallthru
      _
    // Predicated region
    $region34: #{tpu_custom_call.1} parent=1 // pred_check
      _
    $region35: #{tpu_custom_call.1} parent=1 // pred_check_branch
      %39 = sbr.rel (0) target = $region37
    $region36: #{tpu_custom_call.1} parent=1 // pred_region
      _
    $region37: #{tpu_custom_call.1} parent=1 // pred_fallthru
      _
    // Predicated region
    $region38: #{tpu_custom_call.1} parent=1 // pred_check
      _
    $region39: #{tpu_custom_call.1} parent=1 // pred_check_branch
      %41 = sbr.rel (0) target = $region41
    $region40: #{tpu_custom_call.1} parent=1 // pred_region
      _
    $region41: #{tpu_custom_call.1} parent=1 // pred_fallthru
      _
    // Predicated region
    $region42: #{tpu_custom_call.1} parent=1 // pred_check
      _
    $region43: #{tpu_custom_call.1} parent=1 // pred_check_branch
      %43 = sbr.rel (0) target = $region45
    $region44: #{tpu_custom_call.1} parent=1 // pred_region
      _
    $region45: #{tpu_custom_call.1} parent=1 // pred_fallthru
      _
    // Predicated region
    $region46: #{tpu_custom_call.1} parent=1 // pred_check
      _
    $region47: #{tpu_custom_call.1} parent=1 // pred_check_branch
      %45 = sbr.rel (0) target = $region49
    $region48: #{tpu_custom_call.1} parent=1 // pred_region
      _
    $region49: #{tpu_custom_call.1} parent=1 // pred_fallthru
      _
    // Predicated region
    $region50: #{tpu_custom_call.1} parent=1 // pred_check
      _
    $region51: #{tpu_custom_call.1} parent=1 // pred_check_branch
      %47 = sbr.rel (0) target = $region53
    $region52: #{tpu_custom_call.1} parent=1 // pred_region
      _
    $region53: #{tpu_custom_call.1} parent=1 // pred_fallthru
      _
    // Predicated region
    $region54: #{tpu_custom_call.1} parent=1 // pred_check
      _
    $region55: #{tpu_custom_call.1} parent=1 // pred_check_branch
      %49 = sbr.rel (0) target = $region57
    $region56: #{tpu_custom_call.1} parent=1 // pred_region
      _
    $region57: #{tpu_custom_call.1} parent=1 // pred_fallthru
      _
    // Predicated region
    $region58: #{tpu_custom_call.1} parent=1 // pred_check
      _
    $region59: #{tpu_custom_call.1} parent=1 // pred_check_branch
      %51 = sbr.rel (0) target = $region61
    $region60: #{tpu_custom_call.1} parent=1 // pred_region
      _
    $region61: #{tpu_custom_call.1} parent=1 // pred_fallthru
      _
    // Predicated region
    $region62: #{tpu_custom_call.1} parent=1 // pred_check
      _
    $region63: #{tpu_custom_call.1} parent=1 // pred_check_branch
      %53 = sbr.rel (0) target = $region65
    $region64: #{tpu_custom_call.1} parent=1 // pred_region
      _
    $region65: #{tpu_custom_call.1} parent=1 // pred_fallthru
      _
    %p54 = scmp.eq.s32.totalorder 0, 0
    // Predicated region
    $region66: #{tpu_custom_call.1} parent=1 // pred_check
      %p55 = pneg %p54
    $region67: #{tpu_custom_call.1} parent=1 // pred_check_branch
      %57 = sbr.rel (%p55) target = $region69
    $region68: #{tpu_custom_call.1} parent=1 // pred_region
      %vm58 = vcmask 130048
      %59 = vst.msk [vmem:[#allocation2] sm:$0xff] %vm58, 0.0
      %60 = vst.msk [vmem:[#allocation2 + $0x8] sm:$0xff] %vm58, 0.0
      %61 = vst.msk [vmem:[#allocation3] sm:$0xff] %vm58, 0.0
      %62 = vst.msk [vmem:[#allocation3 + $0x8] sm:$0xff] %vm58, 0.0
    $region69: #{tpu_custom_call.1} parent=1 // pred_fallthru
      _
    %v63 = vld [vmem:[%s0] sm:$0xff]
    %v64 = vld [vmem:[%s0 + $0x8] sm:$0xff]
    %v65 = vld [vmem:[%s0 + $0x10] sm:$0xff]
    %v66 = vld [vmem:[%s0 + $0x18] sm:$0xff]
    %v67 = vld [vmem:[%s0 + $0x20] sm:$0xff]
    %v68 = vld [vmem:[%s0 + $0x28] sm:$0xff]
    %v69 = vld [vmem:[%s0 + $0x30] sm:$0xff]
    %v70 = vld [vmem:[%s0 + $0x38] sm:$0xff]
    %v71 = vld [vmem:[%s0 + $0x40] sm:$0xff]
    %v72 = vld [vmem:[%s0 + $0x48] sm:$0xff]
    %v73 = vld [vmem:[%s0 + $0x50] sm:$0xff]
    %v74 = vld [vmem:[%s0 + $0x58] sm:$0xff]
    %v75 = vld [vmem:[%s0 + $0x60] sm:$0xff]
    %v76 = vld [vmem:[%s0 + $0x68] sm:$0xff]
    %v77 = vld [vmem:[%s0 + $0x70] sm:$0xff]
    %v78 = vld [vmem:[%s0 + $0x78] sm:$0xff]
    %v79 = vld [vmem:[%s5] sm:$0xff]
    %v80 = vld [vmem:[%s5 + $0x8] sm:$0xff]
    %v81 = vld [vmem:[%s5 + $0x10] sm:$0xff]
    %v82 = vld [vmem:[%s6] sm:$0x1]
    %v84 = vperm.slane %v82, 0
    %vm86 = vcmask 195584
    %v88 = vsel %vm86, %v63, 0
    %v91 = vsel %vm86, %v64, 0
    %v94 = vsel %vm86, %v65, 0
    %v97 = vsel %vm86, %v66, 0
    %v100 = vsel %vm86, %v67, 0
    %v103 = vsel %vm86, %v68, 0
    %v106 = vsel %vm86, %v69, 0
    %v109 = vsel %vm86, %v70, 0
    %v112 = vsel %vm86, %v71, 0
    %v115 = vsel %vm86, %v72, 0
    %v118 = vsel %vm86, %v73, 0
    %v121 = vsel %vm86, %v74, 0
    %v124 = vsel %vm86, %v75, 0
    %v127 = vsel %vm86, %v76, 0
    %v130 = vsel %vm86, %v77, 0
    %v133 = vsel %vm86, %v78, 0
    %135 = vmatpush.msra.mxu0 0.0
    %136 = vmatpush.msra.mxu0 0.0
    %137 = vmatpush.msra.mxu0 0.0
    %138 = vmatpush.msra.mxu0 0.0
    %139 = vmatpush.msra.mxu0 0.0
    %140 = vmatpush.msra.mxu0 0.0
    %141 = vmatpush.msra.mxu0 0.0
    %142 = vmatpush.msra.mxu0 0.0
    %143 = vmatpush.msra.mxu0 0.0
    %144 = vmatpush.msra.mxu0 0.0
    %145 = vmatpush.msra.mxu0 0.0
    %146 = vmatpush.msra.mxu0 0.0
    %147 = vmatpush.msra.mxu0 0.0
    %148 = vmatpush.msra.mxu0 %v81
    %149 = vmatpush.msra.mxu0 %v80
    %150 = vmatpush.msra.mxu0 %v79
    %151 = vmatmul.f32.gmra.mxu0 %v88
    %v152 = vpop.f32.mrf.mxu0
    %v153 = vadd.f32 %v84, %v152
    %154 = vmatmul.f32.gmra.mxu0 %v91
    %v155 = vpop.f32.mrf.mxu0
    %v156 = vadd.f32 %v84, %v155
    %157 = vmatmul.f32.gmra.mxu0 %v94
    %v158 = vpop.f32.mrf.mxu0
    %v159 = vadd.f32 %v84, %v158
    %160 = vmatmul.f32.gmra.mxu0 %v97
    %v161 = vpop.f32.mrf.mxu0
    %v162 = vadd.f32 %v84, %v161
    %163 = vmatmul.f32.gmra.mxu0 %v100
    %v164 = vpop.f32.mrf.mxu0
    %v165 = vadd.f32 %v84, %v164
    %166 = vmatmul.f32.gmra.mxu0 %v103
    %v167 = vpop.f32.mrf.mxu0
    %v168 = vadd.f32 %v84, %v167
    %169 = vmatmul.f32.gmra.mxu0 %v106
    %v170 = vpop.f32.mrf.mxu0
    %v171 = vadd.f32 %v84, %v170
    %172 = vmatmul.f32.gmra.mxu0 %v109
    %v173 = vpop.f32.mrf.mxu0
    %v174 = vadd.f32 %v84, %v173
    %175 = vmatmul.f32.gmra.mxu0 %v112
    %v176 = vpop.f32.mrf.mxu0
    %v177 = vadd.f32 %v84, %v176
    %178 = vmatmul.f32.gmra.mxu0 %v115
    %v179 = vpop.f32.mrf.mxu0
    %v180 = vadd.f32 %v84, %v179
    %181 = vmatmul.f32.gmra.mxu0 %v118
    %v182 = vpop.f32.mrf.mxu0
    %v183 = vadd.f32 %v84, %v182
    %184 = vmatmul.f32.gmra.mxu0 %v121
    %v185 = vpop.f32.mrf.mxu0
    %v186 = vadd.f32 %v84, %v185
    %187 = vmatmul.f32.gmra.mxu0 %v124
    %v188 = vpop.f32.mrf.mxu0
    %v189 = vadd.f32 %v84, %v188
    %190 = vmatmul.f32.gmra.mxu0 %v127
    %v191 = vpop.f32.mrf.mxu0
    %v192 = vadd.f32 %v84, %v191
    %193 = vmatmul.f32.gmra.mxu0 %v130
    %v194 = vpop.f32.mrf.mxu0
    %v195 = vadd.f32 %v84, %v194
    %196 = vmatmul.f32.gmra.mxu0 %v133
    %v197 = vpop.f32.mrf.mxu0
    %v198 = vadd.f32 %v84, %v197
    %199 = vdwg.mxu0
    %v200 = vmax.f32 %v153, 0.0
    %v201 = vmax.f32 %v156, 0.0
    %v202 = vmax.f32 %v159, 0.0
    %v203 = vmax.f32 %v162, 0.0
    %v204 = vmax.f32 %v165, 0.0
    %v205 = vmax.f32 %v168, 0.0
    %v206 = vmax.f32 %v171, 0.0
    %v207 = vmax.f32 %v174, 0.0
    %v208 = vmax.f32 %v177, 0.0
    %v209 = vmax.f32 %v180, 0.0
    %v210 = vmax.f32 %v183, 0.0
    %v211 = vmax.f32 %v186, 0.0
    %v212 = vmax.f32 %v189, 0.0
    %v213 = vmax.f32 %v192, 0.0
    %v214 = vmax.f32 %v195, 0.0
    %v215 = vmax.f32 %v198, 0.0
    %v216 = vld [vmem:[%s7] sm:$0xff]
    %v217 = vld [vmem:[%s7 + $0x8] sm:$0xff]
    %v218 = vld [vmem:[%s7 + $0x10] sm:$0xff]
    %v219 = vld [vmem:[%s7 + $0x18] sm:$0xff]
    %v220 = vld [vmem:[%s8] sm:$0x1]
    %v222 = vperm.slane %v220, 0
    %vm224 = vcmask 261120
    %v226 = vsel %vm224, %v200, 0
    %v229 = vsel %vm224, %v201, 0
    %v232 = vsel %vm224, %v202, 0
    %v235 = vsel %vm224, %v203, 0
    %v238 = vsel %vm224, %v204, 0
    %v241 = vsel %vm224, %v205, 0
    %v244 = vsel %vm224, %v206, 0
    %v247 = vsel %vm224, %v207, 0
    %v250 = vsel %vm224, %v208, 0
    %v253 = vsel %vm224, %v209, 0
    %v256 = vsel %vm224, %v210, 0
    %v259 = vsel %vm224, %v211, 0
    %v262 = vsel %vm224, %v212, 0
    %v265 = vsel %vm224, %v213, 0
    %v268 = vsel %vm224, %v214, 0
    %v271 = vsel %vm224, %v215, 0
    %273 = vmatpush.msra.mxu0 0.0
    %274 = vmatpush.msra.mxu0 0.0
    %275 = vmatpush.msra.mxu0 0.0
    %276 = vmatpush.msra.mxu0 0.0
    %277 = vmatpush.msra.mxu0 0.0
    %278 = vmatpush.msra.mxu0 0.0
    %279 = vmatpush.msra.mxu0 0.0
    %280 = vmatpush.msra.mxu0 0.0
    %281 = vmatpush.msra.mxu0 0.0
    %282 = vmatpush.msra.mxu0 0.0
    %283 = vmatpush.msra.mxu0 0.0
    %284 = vmatpush.msra.mxu0 0.0
    %285 = vmatpush.msra.mxu0 %v219
    %286 = vmatpush.msra.mxu0 %v218
    %287 = vmatpush.msra.mxu0 %v217
    %288 = vmatpush.msra.mxu0 %v216
    %289 = vmatmul.f32.gmra.mxu0 %v226
    %v290 = vpop.f32.mrf.mxu0
    %v291 = vadd.f32 %v222, %v290
    %292 = vmatmul.f32.gmra.mxu0 %v229
    %v293 = vpop.f32.mrf.mxu0
    %v294 = vadd.f32 %v222, %v293
    %295 = vmatmul.f32.gmra.mxu0 %v232
    %v296 = vpop.f32.mrf.mxu0
    %v297 = vadd.f32 %v222, %v296
    %298 = vmatmul.f32.gmra.mxu0 %v235
    %v299 = vpop.f32.mrf.mxu0
    %v300 = vadd.f32 %v222, %v299
    %301 = vmatmul.f32.gmra.mxu0 %v238
    %v302 = vpop.f32.mrf.mxu0
    %v303 = vadd.f32 %v222, %v302
    %304 = vmatmul.f32.gmra.mxu0 %v241
    %v305 = vpop.f32.mrf.mxu0
    %v306 = vadd.f32 %v222, %v305
    %307 = vmatmul.f32.gmra.mxu0 %v244
    %v308 = vpop.f32.mrf.mxu0
    %v309 = vadd.f32 %v222, %v308
    %310 = vmatmul.f32.gmra.mxu0 %v247
    %v311 = vpop.f32.mrf.mxu0
    %v312 = vadd.f32 %v222, %v311
    %313 = vmatmul.f32.gmra.mxu0 %v250
    %v314 = vpop.f32.mrf.mxu0
    %v315 = vadd.f32 %v222, %v314
    %316 = vmatmul.f32.gmra.mxu0 %v253
    %v317 = vpop.f32.mrf.mxu0
    %v318 = vadd.f32 %v222, %v317
    %319 = vmatmul.f32.gmra.mxu0 %v256
    %v320 = vpop.f32.mrf.mxu0
    %v321 = vadd.f32 %v222, %v320
    %322 = vmatmul.f32.gmra.mxu0 %v259
    %v323 = vpop.f32.mrf.mxu0
    %v324 = vadd.f32 %v222, %v323
    %325 = vmatmul.f32.gmra.mxu0 %v262
    %v326 = vpop.f32.mrf.mxu0
    %v327 = vadd.f32 %v222, %v326
    %328 = vmatmul.f32.gmra.mxu0 %v265
    %v329 = vpop.f32.mrf.mxu0
    %v330 = vadd.f32 %v222, %v329
    %331 = vmatmul.f32.gmra.mxu0 %v268
    %v332 = vpop.f32.mrf.mxu0
    %v333 = vadd.f32 %v222, %v332
    %334 = vmatmul.f32.gmra.mxu0 %v271
    %v335 = vpop.f32.mrf.mxu0
    %v336 = vadd.f32 %v222, %v335
    %337 = vdwg.mxu0
    %v338 = vld [vmem:[%s9] sm:$0xff]
    %v339 = vld [vmem:[%s9 + $0x8] sm:$0xff]
    %v340 = vld [vmem:[%s9 + $0x10] sm:$0xff]
    %v341 = vld [vmem:[%s9 + $0x18] sm:$0xff]
    %v342 = vld [vmem:[%s10] sm:$0x1]
    %v344 = vperm.slane %v342, 0
    %346 = vrot.lane.b32.xlu0 %v200, 96
    %v347 = vpop.permute.xlu0 %346
    %348 = vrot.lane.b32.xlu0 %v201, 96
    %v349 = vpop.permute.xlu0 %348
    %350 = vrot.lane.b32.xlu0 %v202, 96
    %v351 = vpop.permute.xlu0 %350
    %352 = vrot.lane.b32.xlu0 %v203, 96
    %v353 = vpop.permute.xlu0 %352
    %354 = vrot.lane.b32.xlu0 %v204, 96
    %v355 = vpop.permute.xlu0 %354
    %356 = vrot.lane.b32.xlu0 %v205, 96
    %v357 = vpop.permute.xlu0 %356
    %358 = vrot.lane.b32.xlu0 %v206, 96
    %v359 = vpop.permute.xlu0 %358
    %360 = vrot.lane.b32.xlu0 %v207, 96
    %v361 = vpop.permute.xlu0 %360
    %362 = vrot.lane.b32.xlu0 %v208, 96
    %v363 = vpop.permute.xlu0 %362
    %364 = vrot.lane.b32.xlu0 %v209, 96
    %v365 = vpop.permute.xlu0 %364
    %366 = vrot.lane.b32.xlu0 %v210, 96
    %v367 = vpop.permute.xlu0 %366
    %368 = vrot.lane.b32.xlu0 %v211, 96
    %v369 = vpop.permute.xlu0 %368
    %370 = vrot.lane.b32.xlu0 %v212, 96
    %v371 = vpop.permute.xlu0 %370
    %372 = vrot.lane.b32.xlu0 %v213, 96
    %v373 = vpop.permute.xlu0 %372
    %374 = vrot.lane.b32.xlu0 %v214, 96
    %v375 = vpop.permute.xlu0 %374
    %376 = vrot.lane.b32.xlu0 %v215, 96
    %v377 = vpop.permute.xlu0 %376
    %v378 = vsel %vm224, %v347, 0
    %v380 = vsel %vm224, %v349, 0
    %v382 = vsel %vm224, %v351, 0
    %v384 = vsel %vm224, %v353, 0
    %v386 = vsel %vm224, %v355, 0
    %v388 = vsel %vm224, %v357, 0
    %v390 = vsel %vm224, %v359, 0
    %v392 = vsel %vm224, %v361, 0
    %v394 = vsel %vm224, %v363, 0
    %v396 = vsel %vm224, %v365, 0
    %v398 = vsel %vm224, %v367, 0
    %v400 = vsel %vm224, %v369, 0
    %v402 = vsel %vm224, %v371, 0
    %v404 = vsel %vm224, %v373, 0
    %v406 = vsel %vm224, %v375, 0
    %v408 = vsel %vm224, %v377, 0
    %410 = vmatpush.msra.mxu0 0.0
    %411 = vmatpush.msra.mxu0 0.0
    %412 = vmatpush.msra.mxu0 0.0
    %413 = vmatpush.msra.mxu0 0.0
    %414 = vmatpush.msra.mxu0 0.0
    %415 = vmatpush.msra.mxu0 0.0
    %416 = vmatpush.msra.mxu0 0.0
    %417 = vmatpush.msra.mxu0 0.0
    %418 = vmatpush.msra.mxu0 0.0
    %419 = vmatpush.msra.mxu0 0.0
    %420 = vmatpush.msra.mxu0 0.0
    %421 = vmatpush.msra.mxu0 0.0
    %422 = vmatpush.msra.mxu0 %v341
    %423 = vmatpush.msra.mxu0 %v340
    %424 = vmatpush.msra.mxu0 %v339
    %425 = vmatpush.msra.mxu0 %v338
    %426 = vmatmul.f32.gmra.mxu0 %v378
    %v427 = vpop.f32.mrf.mxu0
    %v428 = vadd.f32 %v344, %v427
    %429 = vmatmul.f32.gmra.mxu0 %v380
    %v430 = vpop.f32.mrf.mxu0
    %v431 = vadd.f32 %v344, %v430
    %432 = vmatmul.f32.gmra.mxu0 %v382
    %v433 = vpop.f32.mrf.mxu0
    %v434 = vadd.f32 %v344, %v433
    %435 = vmatmul.f32.gmra.mxu0 %v384
    %v436 = vpop.f32.mrf.mxu0
    %v437 = vadd.f32 %v344, %v436
    %438 = vmatmul.f32.gmra.mxu0 %v386
    %v439 = vpop.f32.mrf.mxu0
    %v440 = vadd.f32 %v344, %v439
    %441 = vmatmul.f32.gmra.mxu0 %v388
    %v442 = vpop.f32.mrf.mxu0
    %v443 = vadd.f32 %v344, %v442
    %444 = vmatmul.f32.gmra.mxu0 %v390
    %v445 = vpop.f32.mrf.mxu0
    %v446 = vadd.f32 %v344, %v445
    %447 = vmatmul.f32.gmra.mxu0 %v392
    %v448 = vpop.f32.mrf.mxu0
    %v449 = vadd.f32 %v344, %v448
    %450 = vmatmul.f32.gmra.mxu0 %v394
    %v451 = vpop.f32.mrf.mxu0
    %v452 = vadd.f32 %v344, %v451
    %453 = vmatmul.f32.gmra.mxu0 %v396
    %v454 = vpop.f32.mrf.mxu0
    %v455 = vadd.f32 %v344, %v454
    %456 = vmatmul.f32.gmra.mxu0 %v398
    %v457 = vpop.f32.mrf.mxu0
    %v458 = vadd.f32 %v344, %v457
    %459 = vmatmul.f32.gmra.mxu0 %v400
    %v460 = vpop.f32.mrf.mxu0
    %v461 = vadd.f32 %v344, %v460
    %462 = vmatmul.f32.gmra.mxu0 %v402
    %v463 = vpop.f32.mrf.mxu0
    %v464 = vadd.f32 %v344, %v463
    %465 = vmatmul.f32.gmra.mxu0 %v404
    %v466 = vpop.f32.mrf.mxu0
    %v467 = vadd.f32 %v344, %v466
    %468 = vmatmul.f32.gmra.mxu0 %v406
    %v469 = vpop.f32.mrf.mxu0
    %v470 = vadd.f32 %v344, %v469
    %471 = vmatmul.f32.gmra.mxu0 %v408
    %v472 = vpop.f32.mrf.mxu0
    %v473 = vadd.f32 %v344, %v472
    %474 = vdwg.mxu0
    %s475 = smul.u32 0, 16
    %v476 = vlaneseq
    %v477 = vshrl.u32 %v476, 7
    %v478 = vadd.s32 %v477, 8
    %v479 = vstv %s475
    %v480 = vadd.s32 %v479, %v477
    %v481 = vadd.s32 %v479, %v478
    %v482 = vld [vmem:[%s1] sm:$0x1]
    %v483 = vperm.slane %v482, 0
    %vm484 = vcmp.eq.s32.totalorder %v483, %v480
    %vm485 = vcmp.eq.s32.totalorder %v483, %v481
    %v486 = vsel %vm484, 1, 0
    %v487 = vsel %vm485, 1, 0
    %v488 = vcvt.s32.f32 %v486
    %v489 = vcvt.s32.f32 %v487
    %v490 = vld [vmem:[%s2] sm:$0x1]
    %v491 = vperm.slane %v490, 0
    %vm492 = vcmp.eq.s32.totalorder %v491, %v480
    %vm493 = vcmp.eq.s32.totalorder %v491, %v481
    %v494 = vsel %vm492, 1, 0
    %v495 = vsel %vm493, 1, 0
    %v496 = vcvt.s32.f32 %v494
    %v497 = vcvt.s32.f32 %v495
    %v498 = vld [vmem:[#allocation2] sm:$0xff]
    %v499 = vld [vmem:[#allocation2 + $0x8] sm:$0xff]
    %500 = vmatpush.msra.mxu0 %v336
    %501 = vmatpush.msra.mxu0 %v333
    %502 = vmatpush.msra.mxu0 %v330
    %503 = vmatpush.msra.mxu0 %v327
    %504 = vmatpush.msra.mxu0 %v324
    %505 = vmatpush.msra.mxu0 %v321
    %506 = vmatpush.msra.mxu0 %v318
    %507 = vmatpush.msra.mxu0 %v315
    %508 = vmatpush.msra.mxu0 %v312
    %509 = vmatpush.msra.mxu0 %v309
    %510 = vmatpush.msra.mxu0 %v306
    %511 = vmatpush.msra.mxu0 %v303
    %512 = vmatpush.msra.mxu0 %v300
    %513 = vmatpush.msra.mxu0 %v297
    %514 = vmatpush.msra.mxu0 %v294
    %515 = vmatpush.msra.mxu0 %v291
    %516 = vmatmul.f32.gmra.mxu0 %v488
    %v517 = vpop.f32.mrf.mxu0
    %v518 = vadd.f32 0.0, %v517
    %519 = vmatmul.f32.gmra.mxu0 %v489
    %v520 = vpop.f32.mrf.mxu0
    %v521 = vadd.f32 0.0, %v520
    %522 = vdwg.mxu0
    %v523 = vadd.f32 %v498, %v518
    %v524 = vadd.f32 %v499, %v521
    %vm525 = vcmask 130048
    %526 = vst.msk [vmem:[#allocation2] sm:$0xff] %vm525, %v523
    %527 = vst.msk [vmem:[#allocation2 + $0x8] sm:$0xff] %vm525, %v524
    %v528 = vld [vmem:[#allocation3] sm:$0xff]
    %v529 = vld [vmem:[#allocation3 + $0x8] sm:$0xff]
    %530 = vmatpush.msra.mxu0 %v473
    %531 = vmatpush.msra.mxu0 %v470
    %532 = vmatpush.msra.mxu0 %v467
    %533 = vmatpush.msra.mxu0 %v464
    %534 = vmatpush.msra.mxu0 %v461
    %535 = vmatpush.msra.mxu0 %v458
    %536 = vmatpush.msra.mxu0 %v455
    %537 = vmatpush.msra.mxu0 %v452
    %538 = vmatpush.msra.mxu0 %v449
    %539 = vmatpush.msra.mxu0 %v446
    %540 = vmatpush.msra.mxu0 %v443
    %541 = vmatpush.msra.mxu0 %v440
    %542 = vmatpush.msra.mxu0 %v437
    %543 = vmatpush.msra.mxu0 %v434
    %544 = vmatpush.msra.mxu0 %v431
    %545 = vmatpush.msra.mxu0 %v428
    %546 = vmatmul.f32.gmra.mxu0 %v496
    %v547 = vpop.f32.mrf.mxu0
    %v548 = vadd.f32 0.0, %v547
    %549 = vmatmul.f32.gmra.mxu0 %v497
    %v550 = vpop.f32.mrf.mxu0
    %v551 = vadd.f32 0.0, %v550
    %552 = vdwg.mxu0
    %v553 = vadd.f32 %v528, %v548
    %v554 = vadd.f32 %v529, %v551
    %555 = vst.msk [vmem:[#allocation3] sm:$0xff] %vm525, %v553
    %556 = vst.msk [vmem:[#allocation3 + $0x8] sm:$0xff] %vm525, %v554
    // Predicated region
    $region70: #{tpu_custom_call.1} parent=1 // pred_check
      %p557 = pneg %p54
    $region71: #{tpu_custom_call.1} parent=1 // pred_check_branch
      %559 = sbr.rel (%p557) target = $region73
    $region72: #{tpu_custom_call.1} parent=1 // pred_region
      %v560 = vld [vmem:[#allocation2] sm:$0xff]
      %v561 = vld [vmem:[#allocation2 + $0x8] sm:$0xff]
      %v562 = vld [vmem:[%s3] sm:$0xff]
      %v563 = vld [vmem:[%s3 + $0x8] sm:$0xff]
      %565 = vset.pattern.permute.xlu0 0
      %566 = vperm.xlu0 %565, %v562
      %v567 = vpop.permute.xlu0 %566
      %570 = vset.pattern.permute.xlu0 0
      %571 = vperm.xlu0 %570, %v563
      %v572 = vpop.permute.xlu0 %571
      %v574 = vmul.f32 %v560, %v567
      %v575 = vmul.f32 %v561, %v572
      %v576 = vld [vmem:[#allocation3] sm:$0xff]
      %v577 = vld [vmem:[#allocation3 + $0x8] sm:$0xff]
      %v578 = vld [vmem:[%s4] sm:$0xff]
      %v579 = vld [vmem:[%s4 + $0x8] sm:$0xff]
      %581 = vset.pattern.permute.xlu0 0
      %582 = vperm.xlu0 %581, %v578
      %v583 = vpop.permute.xlu0 %582
      %586 = vset.pattern.permute.xlu0 0
      %587 = vperm.xlu0 %586, %v579
      %v588 = vpop.permute.xlu0 %587
      %v590 = vmul.f32 %v576, %v583
      %v591 = vmul.f32 %v577, %v588
      %v592 = vld [vmem:[%s11] sm:$0xff]
      %v593 = vld [vmem:[%s11 + $0x8] sm:$0xff]
      %v594 = vld [vmem:[%s12] sm:$0xff]
      %v595 = vld [vmem:[%s12 + $0x8] sm:$0xff]
      %v597 = vsel %vm525, %v590, 0
      %v600 = vsel %vm525, %v591, 0
      %602 = vmatpush.msra.mxu0 0.0
      %603 = vmatpush.msra.mxu0 0.0
      %604 = vmatpush.msra.mxu0 0.0
      %605 = vmatpush.msra.mxu0 0.0
      %606 = vmatpush.msra.mxu0 0.0
      %607 = vmatpush.msra.mxu0 0.0
      %608 = vmatpush.msra.mxu0 0.0
      %609 = vmatpush.msra.mxu0 0.0
      %610 = vmatpush.msra.mxu0 0.0
      %611 = vmatpush.msra.mxu0 0.0
      %612 = vmatpush.msra.mxu0 0.0
      %613 = vmatpush.msra.mxu0 0.0
      %614 = vmatpush.msra.mxu0 0.0
      %615 = vmatpush.msra.mxu0 0.0
      %616 = vmatpush.msra.mxu0 %v595
      %617 = vmatpush.msra.mxu0 %v594
      %618 = vmatmul.f32.gmra.mxu0 %v597
      %v619 = vpop.f32.mrf.mxu0
      %v620 = vadd.f32 0.0, %v619
      %621 = vmatmul.f32.gmra.mxu0 %v600
      %v622 = vpop.f32.mrf.mxu0
      %v623 = vadd.f32 0.0, %v622
      %624 = vdwg.mxu0
      %v626 = vsel %vm525, %v574, 0
      %v629 = vsel %vm525, %v575, 0
      %631 = vmatpush.msra.mxu0 0.0
      %632 = vmatpush.msra.mxu0 0.0
      %633 = vmatpush.msra.mxu0 0.0
      %634 = vmatpush.msra.mxu0 0.0
      %635 = vmatpush.msra.mxu0 0.0
      %636 = vmatpush.msra.mxu0 0.0
      %637 = vmatpush.msra.mxu0 0.0
      %638 = vmatpush.msra.mxu0 0.0
      %639 = vmatpush.msra.mxu0 0.0
      %640 = vmatpush.msra.mxu0 0.0
      %641 = vmatpush.msra.mxu0 0.0
      %642 = vmatpush.msra.mxu0 0.0
      %643 = vmatpush.msra.mxu0 0.0
      %644 = vmatpush.msra.mxu0 0.0
      %645 = vmatpush.msra.mxu0 %v593
      %646 = vmatpush.msra.mxu0 %v592
      %647 = vmatmul.f32.gmra.mxu0 %v626
      %v648 = vpop.f32.mrf.mxu0
      %v649 = vadd.f32 %v620, %v648
      %650 = vmatmul.f32.gmra.mxu0 %v629
      %v651 = vpop.f32.mrf.mxu0
      %v652 = vadd.f32 %v623, %v651
      %653 = vdwg.mxu0
      %v654 = vld [vmem:[%s13] sm:$0x1]
      %v656 = vperm.slane %v654, 0
      %v658 = vadd.f32 %v649, %v656
      %v659 = vadd.f32 %v652, %v656
      %v660 = vmax.f32 %v658, 0.0
      %v661 = vmax.f32 %v659, 0.0
      %v662 = vld [vmem:[%s14] sm:$0xff]
      %v663 = vld [vmem:[%s14 + $0x8] sm:$0xff]
      %v664 = vld [vmem:[%s14 + $0x10] sm:$0xff]
      %v665 = vld [vmem:[%s14 + $0x18] sm:$0xff]
      %v666 = vld [vmem:[%s15] sm:$0x1]
      %v668 = vperm.slane %v666, 0
      %v671 = vsel %vm224, %v660, 0
      %v674 = vsel %vm224, %v661, 0
      %676 = vmatpush.msra.mxu0 0.0
      %677 = vmatpush.msra.mxu0 0.0
      %678 = vmatpush.msra.mxu0 0.0
      %679 = vmatpush.msra.mxu0 0.0
      %680 = vmatpush.msra.mxu0 0.0
      %681 = vmatpush.msra.mxu0 0.0
      %682 = vmatpush.msra.mxu0 0.0
      %683 = vmatpush.msra.mxu0 0.0
      %684 = vmatpush.msra.mxu0 0.0
      %685 = vmatpush.msra.mxu0 0.0
      %686 = vmatpush.msra.mxu0 0.0
      %687 = vmatpush.msra.mxu0 0.0
      %688 = vmatpush.msra.mxu0 %v665
      %689 = vmatpush.msra.mxu0 %v664
      %690 = vmatpush.msra.mxu0 %v663
      %691 = vmatpush.msra.mxu0 %v662
      %692 = vmatmul.f32.gmra.mxu0 %v671
      %v693 = vpop.f32.mrf.mxu0
      %v694 = vadd.f32 %v668, %v693
      %695 = vmatmul.f32.gmra.mxu0 %v674
      %v696 = vpop.f32.mrf.mxu0
      %v697 = vadd.f32 %v668, %v696
      %698 = vdwg.mxu0
      %699 = vst [vmem:[#allocation4] sm:$0xff] %v694
      %700 = vst [vmem:[#allocation4 + $0x8] sm:$0xff] %v697
    $region73: #{tpu_custom_call.1} parent=1 // pred_fallthru
      _
    // Predicated region
    $region74: #{tpu_custom_call.1} parent=1 // pred_check
      _
    $region75: #{tpu_custom_call.1} parent=1 // pred_check_branch
      %702 = sbr.rel (0) target = $region77
    $region76: #{tpu_custom_call.1} parent=1 // pred_region
      %704 = vsyncadd [#allocation5], 0
      %s705 = sshll.u32 [#allocation4], 4
      %s706 = int_to_ptr.vmem [resolvable:$true] %s705
      %s707 = sshll.u32 %s16, 4
      %s708 = int_to_ptr.hbm [resolvable:$true] %s707
      %713 = dma.vmem_to_hbm [thread:$0]  %s706, 256, %s708, [#allocation5], 128, 128, 8
    $region77: #{tpu_custom_call.1} parent=1 // pred_fallthru
      _
    // Predicated region
    $region78: #{tpu_custom_call.1} parent=1 // pred_check
      _
    $region79: #{tpu_custom_call.1} parent=1 // pred_check_branch
      %715 = sbr.rel (0) target = $region81
    $region80: #{tpu_custom_call.1} parent=1 // pred_region
      %717 = dma.done [#allocation5], 256
    $region81: #{tpu_custom_call.1} parent=1 // pred_fallthru
      _
    %718 = vsyncpa [#allocation5], 1

</llo_original>
